<compile_context>
chip_gen: v7x
topology: tpu7x:2x2x1
jax: 0.10.0
libtpu: 0.0.40
codegen_flags: <defaults>
</compile_context>

<pallas_src>
import jax
import jax.numpy as jnp
from jax.experimental import pallas as pl
from jax.experimental.pallas import tpu as pltpu

IN_FEATURES = 4
HIDDEN = 10
OUT_FEATURES = 3

LANE = 128
# Largest batch tile (lane axis).  ~224 B/lane of VMEM (double-buffered,
# 8-sublane-padded x and out blocks plus the padded hidden intermediate), so
# 64K lanes ~= 14 MiB VMEM and ~4 MiB of HBM traffic per grid step -- enough
# to amortize per-step overhead on v5e/v6e/v7x while double-buffering.
MAX_BATCH_TILE = 64 * 1024
# Conservative per-lane VMEM estimate used to size vmem_limit_bytes.
_VMEM_BYTES_PER_LANE = 2 * (8 * 4) + 2 * (8 * 4) + 2 * (16 * 4)


def mlp_kernel(xT_ref, w1_ref, b1_ref, w2_ref, b2_ref, oT_ref):
    # xT: (4, TM)  w1: (10, 4)  b1: (10, 1)  w2: (3, 10)  b2: (3, 1)  oT: (3, TM)
    xT = xT_ref[...]
    h = jnp.dot(w1_ref[...], xT, preferred_element_type=jnp.float32) + b1_ref[...]
    h = jnp.maximum(h, 0.0)  # ReLU
    out = jnp.dot(w2_ref[...], h, preferred_element_type=jnp.float32) + b2_ref[...]
    oT_ref[...] = out.astype(oT_ref.dtype)


def _choose_batch_tile(n):
    """Batch tile: multiple of 128 lanes, <= MAX_BATCH_TILE, padding-bounded."""
    n128 = pl.cdiv(n, LANE) * LANE
    if n128 <= MAX_BATCH_TILE:
        return n128
    n_tiles = pl.cdiv(n128, MAX_BATCH_TILE)
    return pl.cdiv(pl.cdiv(n128, n_tiles), LANE) * LANE


def mlp_forward_t(xT, w1, b1, w2, b2):
    """Lane-dense entry point: xT is (4, N), returns (3, N).

    Use this when the surrounding graph can keep a (features, batch) layout --
    it avoids the HBM transpose round-trips entirely.
    """
    n = xT.shape[1]
    batch_tile = _choose_batch_tile(n)
    n_pad = batch_tile * pl.cdiv(n, batch_tile)
    if n_pad != n:
        xT = jnp.pad(xT, ((0, 0), (0, n_pad - n)))

    b1c = b1.reshape(HIDDEN, 1)
    b2c = b2.reshape(OUT_FEATURES, 1)

    # Scoped-VMEM budget: footprint of this tile + headroom, within every
    # generation's physical VMEM (v7x has 64 MiB).
    vmem_limit = min(
        max(_VMEM_BYTES_PER_LANE * batch_tile + (2 << 20), 16 << 20), 48 << 20
    )

    flops = 2 * n_pad * (IN_FEATURES * HIDDEN + HIDDEN * OUT_FEATURES)
    # Account for 4->8 and 3->8 sublane padding on the activation DMAs.
    bytes_accessed = (
        n_pad * 8 * 4  # padded xT block traffic
        + n_pad * 8 * 4  # padded output block traffic
        + (w1.size + b1c.size + w2.size + b2c.size) * 4
    )

    outT = pl.pallas_call(
        mlp_kernel,
        out_shape=jax.ShapeDtypeStruct((OUT_FEATURES, n_pad), xT.dtype),
        grid=(n_pad // batch_tile,),
        in_specs=[
            # Activations: tiled along the batch (lane) axis.
            pl.BlockSpec((IN_FEATURES, batch_tile), lambda i: (0, i)),
            # Weights / biases: tiny, resident as full blocks every step.
            pl.BlockSpec(w1.shape, lambda i: (0, 0)),
            pl.BlockSpec(b1c.shape, lambda i: (0, 0)),
            pl.BlockSpec(w2.shape, lambda i: (0, 0)),
            pl.BlockSpec(b2c.shape, lambda i: (0, 0)),
        ],
        out_specs=pl.BlockSpec((OUT_FEATURES, batch_tile), lambda i: (0, i)),
        compiler_params=pltpu.CompilerParams(
            dimension_semantics=("parallel",),
            vmem_limit_bytes=vmem_limit,
        ),
        cost_estimate=pl.CostEstimate(
            flops=flops, transcendentals=0, bytes_accessed=bytes_accessed
        ),
    )(xT, w1, b1c, w2, b2c)

    return outT if n_pad == n else outT[:, :n]


def mlp_forward(x, w1, b1, w2, b2):
    """PyTorch-layout wrapper: x is (N, 4), returns (N, 3).

    The transposes here are a single pad+transpose pass each way; callers that
    can keep a (features, batch) layout should use mlp_forward_t directly.
    """
    return mlp_forward_t(x.T, w1, b1, w2, b2).T


def init_params(key):
    # Mirrors nn.Linear's U(-1/sqrt(fan_in), 1/sqrt(fan_in)), PyTorch (out, in) layout.
    k1, k2, k3, k4 = jax.random.split(key, 4)
    bound1 = 1.0 / jnp.sqrt(float(IN_FEATURES))
    bound2 = 1.0 / jnp.sqrt(float(HIDDEN))
    w1 = jax.random.uniform(k1, (HIDDEN, IN_FEATURES), jnp.float32, -bound1, bound1)
    b1 = jax.random.uniform(k2, (HIDDEN,), jnp.float32, -bound1, bound1)
    w2 = jax.random.uniform(k3, (OUT_FEATURES, HIDDEN), jnp.float32, -bound2, bound2)
    b2 = jax.random.uniform(k4, (OUT_FEATURES,), jnp.float32, -bound2, bound2)
    return w1, b1, w2, b2


if __name__ == "__main__":
    key = jax.random.PRNGKey(0)
    key_x, key_p = jax.random.split(key)

    batch = 8
    x = jax.random.normal(key_x, (batch, IN_FEATURES), jnp.float32)
    w1, b1, w2, b2 = init_params(key_p)

    # Pure-JAX reference (PyTorch convention: x @ W^T + b).
    ref = jnp.maximum(x @ w1.T + b1, 0.0) @ w2.T + b2

    # PyTorch-layout path.
    out = jax.block_until_ready(mlp_forward(x, w1, b1, w2, b2))
    assert out.shape == (batch, OUT_FEATURES)
    assert jnp.allclose(out, ref, atol=1e-5, rtol=1e-5)

    # Lane-dense path (no wrapper transposes around the kernel).
    out_t = jax.block_until_ready(mlp_forward_t(x.T, w1, b1, w2, b2))
    assert out_t.shape == (OUT_FEATURES, batch)
    assert jnp.allclose(out_t.T, ref, atol=1e-5, rtol=1e-5)

    print("KERNEL_OK")
</pallas_src>

<mosaic_0001>
module attributes {stable_mosaic.version = 11 : i64} {
  func.func @mlp_kernel(%arg0: i32, %arg1: memref<4x128xf32, #tpu.memory_space<vmem>>, %arg2: memref<10x4xf32, #tpu.memory_space<vmem>>, %arg3: memref<10x1xf32, #tpu.memory_space<vmem>>, %arg4: memref<3x10xf32, #tpu.memory_space<vmem>>, %arg5: memref<3x1xf32, #tpu.memory_space<vmem>>, %arg6: memref<3x128xf32, #tpu.memory_space<vmem>>) attributes {dimension_semantics = [#tpu.dimension_semantics<parallel>], iteration_bounds = array<i64: 1>, scalar_prefetch = 0 : i64, scratch_operands = 0 : i64, tpu.core_type = #tpu.core_type<tc>, window_params = [{transform_indices = @transform_0, window_bounds = array<i64: 4, 128>}, {pipeline_mode = #tpu.pipeline_mode<synchronous>, transform_indices = @transform_1, window_bounds = array<i64: 10, 4>}, {pipeline_mode = #tpu.pipeline_mode<synchronous>, transform_indices = @transform_2, window_bounds = array<i64: 10, 1>}, {pipeline_mode = #tpu.pipeline_mode<synchronous>, transform_indices = @transform_3, window_bounds = array<i64: 3, 10>}, {pipeline_mode = #tpu.pipeline_mode<synchronous>, transform_indices = @transform_4, window_bounds = array<i64: 3, 1>}, {transform_indices = @transform_5, window_bounds = array<i64: 3, 128>}]} {
    %c0 = arith.constant 0 : index
    %c0_0 = arith.constant 0 : index
    %0 = vector.load %arg1[%c0, %c0_0] : memref<4x128xf32, #tpu.memory_space<vmem>>, vector<4x128xf32>
    %c0_1 = arith.constant 0 : index
    %c0_2 = arith.constant 0 : index
    %1 = vector.load %arg2[%c0_1, %c0_2] : memref<10x4xf32, #tpu.memory_space<vmem>>, vector<10x4xf32>
    %cst = arith.constant dense<0.000000e+00> : vector<10x128xf32>
    %2 = tpu.matmul %1, %0, %cst {dimension_numbers = #tpu.dot_dimension_numbers<[1], [0], [0], [1], [0, 0, 1, 1], [], []>} : vector<10x4xf32>, vector<4x128xf32>, vector<10x128xf32> -> vector<10x128xf32>
    %c0_3 = arith.constant 0 : index
    %c0_4 = arith.constant 0 : index
    %3 = vector.load %arg3[%c0_3, %c0_4] : memref<10x1xf32, #tpu.memory_space<vmem>>, vector<10x1xf32>
    %4 = vector.broadcast %3 : vector<10x1xf32> to vector<10x128xf32>
    %5 = arith.addf %2, %4 : vector<10x128xf32>
    %cst_5 = arith.constant 0.000000e+00 : f32
    %6 = vector.broadcast %cst_5 : f32 to vector<10x128xf32>
    %7 = arith.maximumf %5, %6 : vector<10x128xf32>
    %c0_6 = arith.constant 0 : index
    %c0_7 = arith.constant 0 : index
    %8 = vector.load %arg4[%c0_6, %c0_7] : memref<3x10xf32, #tpu.memory_space<vmem>>, vector<3x10xf32>
    %cst_8 = arith.constant dense<0.000000e+00> : vector<3x128xf32>
    %9 = tpu.matmul %8, %7, %cst_8 {dimension_numbers = #tpu.dot_dimension_numbers<[1], [0], [0], [1], [0, 0, 1, 1], [], []>} : vector<3x10xf32>, vector<10x128xf32>, vector<3x128xf32> -> vector<3x128xf32>
    %c0_9 = arith.constant 0 : index
    %c0_10 = arith.constant 0 : index
    %10 = vector.load %arg5[%c0_9, %c0_10] : memref<3x1xf32, #tpu.memory_space<vmem>>, vector<3x1xf32>
    %11 = vector.broadcast %10 : vector<3x1xf32> to vector<3x128xf32>
    %12 = arith.addf %9, %11 : vector<3x128xf32>
    %c0_11 = arith.constant 0 : index
    %c0_12 = arith.constant 0 : index
    %13 = vector.load %arg6[%c0_11, %c0_12] : memref<3x128xf32, #tpu.memory_space<vmem>>, vector<3x128xf32>
    tpu.vector_store %arg6[%c0_11, %c0_12], %12 {strides = array<i32>} : memref<3x128xf32, #tpu.memory_space<vmem>>, vector<3x128xf32>,
    return
  }
  func.func @transform_0(%arg0: i32) -> (i32, i32) {
    %c0_i32 = arith.constant 0 : i32
    %c0_i32_0 = arith.constant 0 : i32
    return %c0_i32, %arg0 : i32, i32
  }
  func.func @transform_1(%arg0: i32) -> (i32, i32) {
    %c0_i32 = arith.constant 0 : i32
    %c0_i32_0 = arith.constant 0 : i32
    %c0_i32_1 = arith.constant 0 : i32
    return %c0_i32, %c0_i32_0 : i32, i32
  }
  func.func @transform_2(%arg0: i32) -> (i32, i32) {
    %c0_i32 = arith.constant 0 : i32
    %c0_i32_0 = arith.constant 0 : i32
    %c0_i32_1 = arith.constant 0 : i32
    return %c0_i32, %c0_i32_0 : i32, i32
  }
  func.func @transform_3(%arg0: i32) -> (i32, i32) {
    %c0_i32 = arith.constant 0 : i32
    %c0_i32_0 = arith.constant 0 : i32
    %c0_i32_1 = arith.constant 0 : i32
    return %c0_i32, %c0_i32_0 : i32, i32
  }
  func.func @transform_4(%arg0: i32) -> (i32, i32) {
    %c0_i32 = arith.constant 0 : i32
    %c0_i32_0 = arith.constant 0 : i32
    %c0_i32_1 = arith.constant 0 : i32
    return %c0_i32, %c0_i32_0 : i32, i32
  }
  func.func @transform_5(%arg0: i32) -> (i32, i32) {
    %c0_i32 = arith.constant 0 : i32
    %c0_i32_0 = arith.constant 0 : i32
    return %c0_i32, %arg0 : i32, i32
  }
}

</mosaic_0001>

<llo_original>
// kernel: tpu_custom_call.1
$region0: #{tpu_custom_call.1}
  #allocation0 [shape = 'u32[]', space=smem, size = 0x4, offset = 0x4, fixed_abs, tag = 'smem constant byte address 0x4 - core index']
  #allocation1 [shape = 'u32[144,128]{1,0:T(1,128)}', space=vmem, size = 0x12000, scoped, tag = 'internal scratch']
  %s0 = inlined_call_operand.vmem [shape: f32[4,128], index: 0, kind: input, shape index: {}]
  %s1 = inlined_call_operand.vmem [shape: f32[10,4], index: 1, kind: input, shape index: {}]
  %s2 = inlined_call_operand.vmem [shape: f32[10,1], index: 2, kind: input, shape index: {}]
  %s3 = inlined_call_operand.vmem [shape: f32[3,10], index: 3, kind: input, shape index: {}]
  %s4 = inlined_call_operand.vmem [shape: f32[3,1], index: 4, kind: input, shape index: {}]
  %s5 = inlined_call_operand.hbm [shape: f32[3,128], index: 5, kind: output, shape index: {}]
  %s6 = sld [smem:[#allocation0]]
  $region30: #{tpu_custom_call.1} parent=0
    _
  %s8 = ssub.s32 1, %s6
  %s9 = scalar_select 0, %s8, %s6
  $region1: #{tpu_custom_call.1} parent=0
    #allocation2 [shape = 'u8[2048]{0}', space=vmem, size = 0x800, scoped, tag = 'output window, operand 0, single buffered']
    #allocation3 [shape = 's32[1]{0}', space=sflag, size = 0x4, scoped, tag = 'scoped memory for tpu_custom_call.1']
    %10 = vsyncpa [#allocation3], 0
    // Predicated region
    $region2: #{tpu_custom_call.1} parent=1 // pred_check
      _
    $region3: #{tpu_custom_call.1} parent=1 // pred_check_branch
      %12 = sbr.rel (0) target = $region5
    $region4: #{tpu_custom_call.1} parent=1 // pred_region
      _
    $region5: #{tpu_custom_call.1} parent=1 // pred_fallthru
      _
    // Predicated region
    $region6: #{tpu_custom_call.1} parent=1 // pred_check
      _
    $region7: #{tpu_custom_call.1} parent=1 // pred_check_branch
      %14 = sbr.rel (0) target = $region9
    $region8: #{tpu_custom_call.1} parent=1 // pred_region
      _
    $region9: #{tpu_custom_call.1} parent=1 // pred_fallthru
      _
    // Predicated region
    $region10: #{tpu_custom_call.1} parent=1 // pred_check
      _
    $region11: #{tpu_custom_call.1} parent=1 // pred_check_branch
      %16 = sbr.rel (0) target = $region13
    $region12: #{tpu_custom_call.1} parent=1 // pred_region
      _
    $region13: #{tpu_custom_call.1} parent=1 // pred_fallthru
      _
    // Predicated region
    $region14: #{tpu_custom_call.1} parent=1 // pred_check
      _
    $region15: #{tpu_custom_call.1} parent=1 // pred_check_branch
      %18 = sbr.rel (0) target = $region17
    $region16: #{tpu_custom_call.1} parent=1 // pred_region
      _
    $region17: #{tpu_custom_call.1} parent=1 // pred_fallthru
      _
    // Predicated region
    $region18: #{tpu_custom_call.1} parent=1 // pred_check
      _
    $region19: #{tpu_custom_call.1} parent=1 // pred_check_branch
      %20 = sbr.rel (0) target = $region21
    $region20: #{tpu_custom_call.1} parent=1 // pred_region
      _
    $region21: #{tpu_custom_call.1} parent=1 // pred_fallthru
      _
    %v21 = vld [vmem:[%s0] sm:$0xf]
    %v22 = vld [vmem:[%s1] sm:$0xff]
    %v23 = vld [vmem:[%s1 + $0x8] sm:$0x3]
    %v24 = vld [vmem:[%s2] sm:$0xff]
    %v25 = vld [vmem:[%s2 + $0x8] sm:$0x3]
    %27 = vset.pattern.permute.xlu0 0
    %28 = vperm.xlu0 %27, %v24
    %v29 = vpop.permute.xlu0 %28
    %32 = vset.pattern.permute.xlu0 0
    %33 = vperm.xlu0 %32, %v25
    %v34 = vpop.permute.xlu0 %33
    %vm36 = vcmask 31744
    %v38 = vsel %vm36, %v22, 0
    %v41 = vsel %vm36, %v23, 0
    %vm43 = vcmask 1043456
    %v45 = vsel %vm43, %v21, 0
    %47 = vmatprep.subr.mxu0 0.0
    %48 = vmatpush1.msra.mxu0 %v45
    %49 = vmatprep.subr.mxu0 0.0
    %50 = vmatpush1.msra.mxu0 0.0
    %51 = vmatprep.subr.mxu0 0.0
    %52 = vmatpush1.msra.mxu0 0.0
    %53 = vmatprep.subr.mxu0 0.0
    %54 = vmatpush1.msra.mxu0 0.0
    %55 = vmatprep.subr.mxu0 0.0
    %56 = vmatpush1.msra.mxu0 0.0
    %57 = vmatprep.subr.mxu0 0.0
    %58 = vmatpush1.msra.mxu0 0.0
    %59 = vmatprep.subr.mxu0 0.0
    %60 = vmatpush1.msra.mxu0 0.0
    %61 = vmatprep.subr.mxu0 0.0
    %62 = vmatpush1.msra.mxu0 0.0
    %63 = vmatprep.subr.mxu0 0.0
    %64 = vmatpush1.msra.mxu0 0.0
    %65 = vmatprep.subr.mxu0 0.0
    %66 = vmatpush1.msra.mxu0 0.0
    %67 = vmatprep.subr.mxu0 0.0
    %68 = vmatpush1.msra.mxu0 0.0
    %69 = vmatprep.subr.mxu0 0.0
    %70 = vmatpush1.msra.mxu0 0.0
    %71 = vmatprep.subr.mxu0 0.0
    %72 = vmatpush1.msra.mxu0 0.0
    %73 = vmatprep.subr.mxu0 0.0
    %74 = vmatpush1.msra.mxu0 0.0
    %75 = vmatprep.subr.mxu0 0.0
    %76 = vmatpush1.msra.mxu0 0.0
    %77 = vmatprep.subr.mxu0 0.0
    %78 = vmatpush1.msra.mxu0 0.0
    %79 = vmatprep.subr.mxu0 0.0
    %80 = vmatpush1.msra.mxu0 0.0
    %81 = vmatprep.subr.mxu0 0.0
    %82 = vmatpush1.msra.mxu0 0.0
    %83 = vmatprep.subr.mxu0 0.0
    %84 = vmatpush1.msra.mxu0 0.0
    %85 = vmatprep.subr.mxu0 0.0
    %86 = vmatpush1.msra.mxu0 0.0
    %87 = vmatprep.subr.mxu0 0.0
    %88 = vmatpush1.msra.mxu0 0.0
    %89 = vmatprep.subr.mxu0 0.0
    %90 = vmatpush1.msra.mxu0 0.0
    %91 = vmatprep.subr.mxu0 0.0
    %92 = vmatpush1.msra.mxu0 0.0
    %93 = vmatprep.subr.mxu0 0.0
    %94 = vmatpush1.msra.mxu0 0.0
    %95 = vmatprep.subr.mxu0 0.0
    %96 = vmatpush1.msra.mxu0 0.0
    %97 = vmatprep.subr.mxu0 0.0
    %98 = vmatpush1.msra.mxu0 0.0
    %99 = vmatprep.subr.mxu0 0.0
    %100 = vmatpush1.msra.mxu0 0.0
    %101 = vmatprep.subr.mxu0 0.0
    %102 = vmatpush1.msra.mxu0 0.0
    %103 = vmatprep.subr.mxu0 0.0
    %104 = vmatpush1.msra.mxu0 0.0
    %105 = vmatprep.subr.mxu0 0.0
    %106 = vmatpush1.msra.mxu0 0.0
    %107 = vmatprep.subr.mxu0 0.0
    %108 = vmatpush1.msra.mxu0 0.0
    %109 = vmatprep.subr.mxu0 0.0
    %110 = vmatpush1.msra.mxu0 0.0
    %111 = vmatprep.mubr.f32.mxu0 0.0
    %112 = vmatmul.mubr.f32.gmra.mrb[0].mxu0 %v38
    %v113 = vpop.f32.mrb[0].mxu0
    %v114 = vadd.f32 %v29, %v113
    %v115 = vpop.f32.mrb[0].mxu0
    %116 = vmatprep.mubr.f32.mxu0 0.0
    %117 = vmatmul.mubr.f32.gmra.mrb[0].mxu0 %v41
    %v118 = vpop.f32.mrb[0].mxu0
    %v119 = vadd.f32 %v34, %v118
    %v120 = vpop.f32.mrb[0].mxu0
    %121 = vdwg.mxu0
    %v122 = vmax.f32 %v114, 0.0
    %v123 = vmax.f32 %v119, 0.0
    %v124 = vld [vmem:[%s3] sm:$0x7]
    %v125 = vld [vmem:[%s4] sm:$0x7]
    %127 = vset.pattern.permute.xlu0 0
    %128 = vperm.xlu0 %127, %v125
    %v129 = vpop.permute.xlu0 %128
    %vm131 = vcmask 80896
    %v133 = vsel %vm131, %v124, 0
    %vm135 = vcmask 1041408
    %v137 = vsel %vm135, %v123, 0
    %139 = vmatprep.subr.mxu0 0.0
    %140 = vmatpush1.msra.mxu0 %v122
    %141 = vmatprep.subr.mxu0 0.0
    %142 = vmatpush1.msra.mxu0 %v137
    %143 = vmatprep.subr.mxu0 0.0
    %144 = vmatpush1.msra.mxu0 0.0
    %145 = vmatprep.subr.mxu0 0.0
    %146 = vmatpush1.msra.mxu0 0.0
    %147 = vmatprep.subr.mxu0 0.0
    %148 = vmatpush1.msra.mxu0 0.0
    %149 = vmatprep.subr.mxu0 0.0
    %150 = vmatpush1.msra.mxu0 0.0
    %151 = vmatprep.subr.mxu0 0.0
    %152 = vmatpush1.msra.mxu0 0.0
    %153 = vmatprep.subr.mxu0 0.0
    %154 = vmatpush1.msra.mxu0 0.0
    %155 = vmatprep.subr.mxu0 0.0
    %156 = vmatpush1.msra.mxu0 0.0
    %157 = vmatprep.subr.mxu0 0.0
    %158 = vmatpush1.msra.mxu0 0.0
    %159 = vmatprep.subr.mxu0 0.0
    %160 = vmatpush1.msra.mxu0 0.0
    %161 = vmatprep.subr.mxu0 0.0
    %162 = vmatpush1.msra.mxu0 0.0
    %163 = vmatprep.subr.mxu0 0.0
    %164 = vmatpush1.msra.mxu0 0.0
    %165 = vmatprep.subr.mxu0 0.0
    %166 = vmatpush1.msra.mxu0 0.0
    %167 = vmatprep.subr.mxu0 0.0
    %168 = vmatpush1.msra.mxu0 0.0
    %169 = vmatprep.subr.mxu0 0.0
    %170 = vmatpush1.msra.mxu0 0.0
    %171 = vmatprep.subr.mxu0 0.0
    %172 = vmatpush1.msra.mxu0 0.0
    %173 = vmatprep.subr.mxu0 0.0
    %174 = vmatpush1.msra.mxu0 0.0
    %175 = vmatprep.subr.mxu0 0.0
    %176 = vmatpush1.msra.mxu0 0.0
    %177 = vmatprep.subr.mxu0 0.0
    %178 = vmatpush1.msra.mxu0 0.0
    %179 = vmatprep.subr.mxu0 0.0
    %180 = vmatpush1.msra.mxu0 0.0
    %181 = vmatprep.subr.mxu0 0.0
    %182 = vmatpush1.msra.mxu0 0.0
    %183 = vmatprep.subr.mxu0 0.0
    %184 = vmatpush1.msra.mxu0 0.0
    %185 = vmatprep.subr.mxu0 0.0
    %186 = vmatpush1.msra.mxu0 0.0
    %187 = vmatprep.subr.mxu0 0.0
    %188 = vmatpush1.msra.mxu0 0.0
    %189 = vmatprep.subr.mxu0 0.0
    %190 = vmatpush1.msra.mxu0 0.0
    %191 = vmatprep.subr.mxu0 0.0
    %192 = vmatpush1.msra.mxu0 0.0
    %193 = vmatprep.subr.mxu0 0.0
    %194 = vmatpush1.msra.mxu0 0.0
    %195 = vmatprep.subr.mxu0 0.0
    %196 = vmatpush1.msra.mxu0 0.0
    %197 = vmatprep.subr.mxu0 0.0
    %198 = vmatpush1.msra.mxu0 0.0
    %199 = vmatprep.subr.mxu0 0.0
    %200 = vmatpush1.msra.mxu0 0.0
    %201 = vmatprep.subr.mxu0 0.0
    %202 = vmatpush1.msra.mxu0 0.0
    %203 = vmatprep.mubr.f32.mxu0 0.0
    %204 = vmatmul.mubr.f32.gmra.mrb[0].mxu0 %v133
    %v205 = vpop.f32.mrb[0].mxu0
    %v206 = vadd.f32 %v129, %v205
    %v207 = vpop.f32.mrb[0].mxu0
    %208 = vdwg.mxu0
    %209 = vst [vmem:[#allocation2] sm:$0x7] %v206
    // Predicated region
    $region22: #{tpu_custom_call.1} parent=1 // pred_check
      _
    $region23: #{tpu_custom_call.1} parent=1 // pred_check_branch
      %211 = sbr.rel (0) target = $region25
    $region24: #{tpu_custom_call.1} parent=1 // pred_region
      %s213 = ssub.s32 64, 64
      %214 = vsyncadd [#allocation3], %s213
      %s216 = sshll.u32 [#allocation2], 4
      %s217 = int_to_ptr.vmem [resolvable:$true] %s216
      %219 = dma.vmem_to_hbm [thread:$0]  %s217, 64, %s5, [#allocation3]
    $region25: #{tpu_custom_call.1} parent=1 // pred_fallthru
      _
    // Predicated region
    $region26: #{tpu_custom_call.1} parent=1 // pred_check
      _
    $region27: #{tpu_custom_call.1} parent=1 // pred_check_branch
      %221 = sbr.rel (0) target = $region29
    $region28: #{tpu_custom_call.1} parent=1 // pred_region
      %222 = dma.done [#allocation3], 64
    $region29: #{tpu_custom_call.1} parent=1 // pred_fallthru
      _
    %223 = vsyncpa [#allocation3], 1

</llo_original>
